<compile_context>
chip_gen: v7x
topology: tpu7x:2x2x1
jax: 0.10.0
libtpu: 0.0.40
codegen_flags: <defaults>
</compile_context>

<pallas_src>
import functools

import jax
import jax.numpy as jnp
from jax.experimental import pallas as pl
from jax.experimental.pallas import tpu as pltpu


def _round_up(x, m):
    return ((x + m - 1) // m) * m


# ----------------------------------------------------------------------------
# Kernel
# ----------------------------------------------------------------------------
def _dcn_kernel(*refs, num_cross_layers, mlp_out_dims, feat_dim, h_last,
                compute_dtype):
    # refs = (x, cols_f32, rows_f32, w_mlp_0, ..., w_mlp_{n-1}, out)
    x_ref, cols_ref, rows_ref = refs[0], refs[1], refs[2]
    n_mlp = len(mlp_out_dims)
    w_mlp_refs = refs[3:3 + n_mlp]
    o_ref = refs[3 + n_mlp]

    L, D = num_cross_layers, feat_dim

    # x streams in its native dtype; single cast to f32 for elementwise math.
    x0 = x_ref[...].astype(jnp.float32)                     # [TB, D]

    # --- CrossNetwork: x_{i+1} = x0 * (x_i @ w_i) + b_i + x_i
    # The width-1 dot runs on the (otherwise idle) MXU with f32 accumulation;
    # the elementwise update stays on the VPU.
    xc = x0
    for i in range(L):                                      # L is small; unrolled
        w_col = cols_ref[0:D, i:i + 1]                      # [D, 1]  f32
        b_row = rows_ref[i:i + 1, 0:D]                      # [1, D]  f32
        xw = jnp.dot(xc, w_col, preferred_element_type=jnp.float32)   # [TB, 1]
        xc = x0 * xw + b_row + xc
    x_l1 = xc

    # --- MLP: Linear (eval-BN + bias folded on host) -> ReLU; Dropout(eval)=id.
    act = x0.astype(compute_dtype)                          # one cast for MXU feed
    h_l2 = x0
    for j in range(n_mlp):
        w = w_mlp_refs[j][...]                              # [in, out] compute_dtype
        b = rows_ref[L + j:L + j + 1, 0:mlp_out_dims[j]]    # [1, out]  f32 (folded)
        z = jnp.dot(act, w, preferred_element_type=jnp.float32) + b
        h_l2 = jnp.maximum(z, 0.0)                          # keep f32 for final dot
        if j + 1 < n_mlp:
            act = h_l2.astype(compute_dtype)

    # --- Final Linear on concat([x_l1, h_l2]) without the concat:
    # the [1, D+H] weight is split into two N=1 MXU dots + bias.
    wf_cn_col = cols_ref[0:D, L:L + 1]                      # [D, 1]
    wf_mlp_col = cols_ref[0:h_last, L + 1:L + 2]            # [H_last, 1]
    bf = rows_ref[L + n_mlp:L + n_mlp + 1, 0:1]             # [1, 1]
    p = (jnp.dot(x_l1, wf_cn_col, preferred_element_type=jnp.float32)
         + jnp.dot(h_l2, wf_mlp_col, preferred_element_type=jnp.float32)
         + bf)
    o_ref[...] = p.astype(o_ref.dtype)


# ----------------------------------------------------------------------------
# Wrapper
# ----------------------------------------------------------------------------
def dcn_forward(x, prepared, *, block_rows=2048, min_grid_steps=8):
    """x: [B, D] (f32 or bf16). prepared: output of prepare_params()."""
    B, D = x.shape
    assert D == prepared["D"]
    L = prepared["L"]
    mlp_dims = prepared["mlp_dims"]
    compute_dtype = prepared["compute_dtype"]

    # Tile selection:
    #  * multiple of 8 (sublane alignment),
    #  * capped so the parallel grid keeps >= min_grid_steps steps when B allows
    #    (feeds both TensorCores on v7x),
    #  * at D=64 a 2048-row tile is ~0.5 MiB f32 (x) + ~1.5 MiB f32 intermediates
    #    -> well under every generation's scoped-VMEM default, so no explicit
    #    vmem_limit_bytes is needed.
    tb = _round_up(min(block_rows, B), 8)
    tb = min(tb, max(8, _round_up(pl.cdiv(B, min_grid_steps), 8)))

    x_in = x
    b_pad = _round_up(B, tb)
    if b_pad != B:
        # Only hit when tb does not divide B; padded rows produce garbage that is
        # sliced off below (do not reduce over the padded output).
        x_in = jnp.pad(x, ((0, b_pad - B), (0, 0)))
    grid = (b_pad // tb,)

    param_arrays = [prepared["cols"], prepared["rows"]] + list(prepared["mlp_ws"])

    in_specs = [pl.BlockSpec((tb, D), lambda i: (i, 0))]
    # Small packed parameters: whole-array blocks, fetched once (constant index).
    in_specs += [pl.BlockSpec(a.shape, lambda i: (0, 0)) for a in param_arrays]
    out_specs = pl.BlockSpec((tb, 1), lambda i: (i, 0))

    kernel = functools.partial(
        _dcn_kernel,
        num_cross_layers=L,
        mlp_out_dims=mlp_dims,
        feat_dim=D,
        h_last=prepared["H_last"],
        compute_dtype=compute_dtype)

    out = pl.pallas_call(
        kernel,
        out_shape=jax.ShapeDtypeStruct((b_pad, 1), jnp.float32),
        grid=grid,
        in_specs=in_specs,
        out_specs=out_specs,
        compiler_params=pltpu.CompilerParams(
            dimension_semantics=("parallel",)),
    )(x_in, *param_arrays)
    return out[:B]


# ----------------------------------------------------------------------------
# Host-side parameter folding + packing
#   * eval-mode BatchNorm + Linear bias folded into the MLP weights/biases
#   * all N=1 weights packed as columns of one f32 array ("cols")
#   * all broadcast biases packed as rows of one f32 array ("rows")
# ----------------------------------------------------------------------------
def prepare_params(raw, compute_dtype=jnp.bfloat16, eps=1e-5):
    cross_w = raw["cross_w"].astype(jnp.float32)            # [L, D]
    cross_b = raw["cross_b"].astype(jnp.float32)            # [L, D]
    L, D = cross_w.shape

    mlp_ws, mlp_bs, mlp_dims, mlp_wb = [], [], [], []
    for (lw, lb, gamma, beta, mean, var) in raw["mlp"]:
        scale = gamma / jnp.sqrt(var + eps)                  # [out]
        w_fold = (lw * scale[:, None]).T                     # [in, out]
        b_fold = (lb - mean) * scale + beta                  # [out]
        w_c = w_fold.astype(compute_dtype)
        b_f = b_fold.astype(jnp.float32)
        mlp_ws.append(w_c)
        mlp_bs.append(b_f)
        mlp_wb.append((w_c, b_f))
        mlp_dims.append(int(lw.shape[0]))
    H_last = mlp_dims[-1] if mlp_dims else D

    wf = raw["final_w"].astype(jnp.float32).reshape(-1)      # [D + H_last]
    wf_cn, wf_mlp = wf[:D], wf[D:]
    bf = jnp.asarray(raw["final_b"], jnp.float32).reshape(())

    # Packed "columns" array: every output-width-1 MXU weight as a column.
    rc = max(D, H_last)
    cols = jnp.zeros((rc, L + 2), jnp.float32)
    cols = cols.at[:D, :L].set(cross_w.T)
    cols = cols.at[:D, L].set(wf_cn)
    cols = cols.at[:H_last, L + 1].set(wf_mlp)

    # Packed "rows" array: cross biases, folded MLP biases, final bias.
    cr = max([D] + mlp_dims + [1])
    rows = jnp.zeros((L + len(mlp_dims) + 1, cr), jnp.float32)
    rows = rows.at[:L, :D].set(cross_b)
    for j, b in enumerate(mlp_bs):
        rows = rows.at[L + j, :b.shape[0]].set(b)
    rows = rows.at[L + len(mlp_dims), 0].set(bf)

    return {
        "cols": cols, "rows": rows, "mlp_ws": mlp_ws,
        "L": L, "D": D, "mlp_dims": tuple(mlp_dims), "H_last": H_last,
        "compute_dtype": compute_dtype,
        # Unpacked folded pieces, kept only for the mirrored reference check.
        "cross_w": cross_w, "cross_b": cross_b, "mlp_wb": mlp_wb,
        "wf_cn": wf_cn, "wf_mlp": wf_mlp, "bf": bf,
    }


def init_raw_params(key, num_fields, embed_dim, num_cross_layers, mlp_dims):
    """PyTorch-layout parameters (Linear weights [out,in], BN running stats)."""
    D = num_fields * embed_dim
    n_mlp = len(mlp_dims)
    keys = iter(jax.random.split(key, 4 + 6 * n_mlp))

    def uniform(k, shape, bound):
        return jax.random.uniform(k, shape, jnp.float32, -bound, bound)

    bound_cn = 1.0 / jnp.sqrt(D)
    cross_w = uniform(next(keys), (num_cross_layers, D), bound_cn)
    # PyTorch inits the cross biases to zero; use small random values so the
    # correctness check actually exercises them.
    cross_b = 0.05 * jax.random.normal(next(keys), (num_cross_layers, D),
                                       jnp.float32)

    mlp = []
    in_dim = D
    for h in mlp_dims:
        bound = 1.0 / jnp.sqrt(in_dim)
        lw = uniform(next(keys), (h, in_dim), bound)
        lb = uniform(next(keys), (h,), bound)
        gamma = jax.random.uniform(next(keys), (h,), jnp.float32, 0.5, 1.5)
        beta = 0.1 * jax.random.normal(next(keys), (h,), jnp.float32)
        mean = 0.1 * jax.random.normal(next(keys), (h,), jnp.float32)
        var = jax.random.uniform(next(keys), (h,), jnp.float32, 0.5, 1.5)
        mlp.append((lw, lb, gamma, beta, mean, var))
        in_dim = h

    bound_f = 1.0 / jnp.sqrt(D + mlp_dims[-1])
    final_w = uniform(next(keys), (1, D + mlp_dims[-1]), bound_f)
    final_b = uniform(next(keys), (1,), bound_f)
    return {"cross_w": cross_w, "cross_b": cross_b, "mlp": mlp,
            "final_w": final_w, "final_b": final_b}


# ----------------------------------------------------------------------------
# References
# ----------------------------------------------------------------------------
def dcn_reference_f32(x, raw, eps=1e-5):
    """PyTorch-faithful forward in full float32 (eval-mode BN / Dropout)."""
    x0 = x.astype(jnp.float32)
    xc = x0
    for i in range(raw["cross_w"].shape[0]):
        w = raw["cross_w"][i]                                  # [D]
        b = raw["cross_b"][i]                                  # [D]
        xw = xc @ w[:, None]                                   # [B, 1]
        xc = x0 * xw + b[None, :] + xc
    h = x0
    for (lw, lb, gamma, beta, mean, var) in raw["mlp"]:
        z = h @ lw.T + lb[None, :]
        z = (z - mean[None, :]) / jnp.sqrt(var[None, :] + eps) * gamma[None, :] \
            + beta[None, :]
        h = jnp.maximum(z, 0.0)                                # Dropout: identity
    stack = jnp.concatenate([xc, h], axis=1)
    return stack @ raw["final_w"].T + raw["final_b"][None, :]


def dcn_reference_mirrored(x, prepared):
    """Pure-JAX reference mirroring the kernel's folded-param numerics
    (uses the UNpacked folded params, so it also validates the packing)."""
    cd = prepared["compute_dtype"]
    x0 = x.astype(jnp.float32)
    xc = x0
    for i in range(prepared["L"]):
        xw = jnp.dot(xc, prepared["cross_w"][i][:, None],
                     preferred_element_type=jnp.float32)
        xc = x0 * xw + prepared["cross_b"][i][None, :] + xc
    act = x0.astype(cd)
    h = x0
    for (w, b) in prepared["mlp_wb"]:
        z = jnp.dot(act, w, preferred_element_type=jnp.float32) + b[None, :]
        h = jnp.maximum(z, 0.0)
        act = h.astype(cd)
    return (jnp.dot(xc, prepared["wf_cn"][:, None],
                    preferred_element_type=jnp.float32)
            + jnp.dot(h, prepared["wf_mlp"][:, None],
                      preferred_element_type=jnp.float32)
            + prepared["bf"])


# ----------------------------------------------------------------------------
# Demo
# ----------------------------------------------------------------------------
if __name__ == "__main__":
    # Small shapes consistent with the module:
    #   embed_output_dim = len(field_dims) * embed_dim
    num_fields, embed_dim = 8, 8        # D = 64
    num_cross_layers = 3
    mlp_dims = (64, 32)
    dropout = 0.2                       # identity in eval mode
    B = 96

    key = jax.random.PRNGKey(0)
    k_x, k_p = jax.random.split(key)
    D = num_fields * embed_dim
    # forward() consumes already-embedded features (embed_x = x).
    emb_x = jax.random.normal(k_x, (B, num_fields, embed_dim), jnp.float32)
    x = emb_x.reshape(B, D)

    raw = init_raw_params(k_p, num_fields, embed_dim, num_cross_layers, mlp_dims)
    prepared = prepare_params(raw, compute_dtype=jnp.bfloat16)

    # Default block_rows; the min-grid-steps cap yields tb=16 -> a 6-step grid
    # at this tiny B, exercising the batch pipeline. Large B uses 2048-row tiles.
    out = dcn_forward(x, prepared)
    out = jax.block_until_ready(out)
    assert out.shape == (B, 1)

    # Tight check against a reference with matching folded-param numerics.
    ref_mirror = dcn_reference_mirrored(x, prepared)
    err_mirror = float(jnp.max(jnp.abs(out - ref_mirror)))
    assert jnp.allclose(out, ref_mirror, atol=3e-3, rtol=3e-3), (
        f"mirrored-reference mismatch, max abs err {err_mirror}")

    # Loose sanity check against the full-f32 PyTorch-faithful math
    # (difference is only bf16 MLP weight/activation rounding).
    ref_f32 = dcn_reference_f32(x, raw)
    err_f32 = float(jnp.max(jnp.abs(out - ref_f32)))
    assert err_f32 < 0.25, f"f32-reference deviation too large: {err_f32}"

    print("KERNEL_OK")
</pallas_src>

<mosaic_0001>
module attributes {stable_mosaic.version = 11 : i64} {
  func.func @_dcn_kernel(%arg0: i32, %arg1: memref<16x64xf32, #tpu.memory_space<vmem>>, %arg2: memref<64x5xf32, #tpu.memory_space<vmem>>, %arg3: memref<6x64xf32, #tpu.memory_space<vmem>>, %arg4: memref<64x64xbf16, #tpu.memory_space<vmem>>, %arg5: memref<64x32xbf16, #tpu.memory_space<vmem>>, %arg6: memref<16x1xf32, #tpu.memory_space<vmem>>) attributes {dimension_semantics = [#tpu.dimension_semantics<parallel>], iteration_bounds = array<i64: 6>, scalar_prefetch = 0 : i64, scratch_operands = 0 : i64, tpu.core_type = #tpu.core_type<tc>, window_params = [{transform_indices = @transform_0, window_bounds = array<i64: 16, 64>}, {pipeline_mode = #tpu.pipeline_mode<synchronous>, transform_indices = @transform_1, window_bounds = array<i64: 64, 5>}, {pipeline_mode = #tpu.pipeline_mode<synchronous>, transform_indices = @transform_2, window_bounds = array<i64: 6, 64>}, {pipeline_mode = #tpu.pipeline_mode<synchronous>, transform_indices = @transform_3, window_bounds = array<i64: 64, 64>}, {pipeline_mode = #tpu.pipeline_mode<synchronous>, transform_indices = @transform_4, window_bounds = array<i64: 64, 32>}, {transform_indices = @transform_5, window_bounds = array<i64: 16, 1>}]} {
    %c0 = arith.constant 0 : index
    %c0_0 = arith.constant 0 : index
    %0 = vector.load %arg1[%c0, %c0_0] : memref<16x64xf32, #tpu.memory_space<vmem>>, vector<16x64xf32>
    %c0_1 = arith.constant 0 : index
    %c0_2 = arith.constant 0 : index
    %1 = vector.load %arg2[%c0_1, %c0_2] : memref<64x5xf32, #tpu.memory_space<vmem>>, vector<64x1xf32>
    %c0_3 = arith.constant 0 : index
    %c0_4 = arith.constant 0 : index
    %2 = vector.load %arg3[%c0_3, %c0_4] : memref<6x64xf32, #tpu.memory_space<vmem>>, vector<1x64xf32>
    %cst = arith.constant dense<0.000000e+00> : vector<16x1xf32>
    %3 = tpu.matmul %0, %1, %cst {dimension_numbers = #tpu.dot_dimension_numbers<[1], [0], [0], [1], [0, 0, 1, 1], [], []>} : vector<16x64xf32>, vector<64x1xf32>, vector<16x1xf32> -> vector<16x1xf32>
    %4 = vector.broadcast %3 : vector<16x1xf32> to vector<16x64xf32>
    %5 = arith.mulf %0, %4 : vector<16x64xf32>
    %6 = vector.broadcast %2 : vector<1x64xf32> to vector<16x64xf32>
    %7 = arith.addf %5, %6 : vector<16x64xf32>
    %8 = arith.addf %7, %0 : vector<16x64xf32>
    %c0_5 = arith.constant 0 : index
    %c1 = arith.constant 1 : index
    %9 = vector.load %arg2[%c0_5, %c1] : memref<64x5xf32, #tpu.memory_space<vmem>>, vector<64x1xf32>
    %c1_6 = arith.constant 1 : index
    %c0_7 = arith.constant 0 : index
    %10 = vector.load %arg3[%c1_6, %c0_7] : memref<6x64xf32, #tpu.memory_space<vmem>>, vector<1x64xf32>
    %cst_8 = arith.constant dense<0.000000e+00> : vector<16x1xf32>
    %11 = tpu.matmul %8, %9, %cst_8 {dimension_numbers = #tpu.dot_dimension_numbers<[1], [0], [0], [1], [0, 0, 1, 1], [], []>} : vector<16x64xf32>, vector<64x1xf32>, vector<16x1xf32> -> vector<16x1xf32>
    %12 = vector.broadcast %11 : vector<16x1xf32> to vector<16x64xf32>
    %13 = arith.mulf %0, %12 : vector<16x64xf32>
    %14 = vector.broadcast %10 : vector<1x64xf32> to vector<16x64xf32>
    %15 = arith.addf %13, %14 : vector<16x64xf32>
    %16 = arith.addf %15, %8 : vector<16x64xf32>
    %c0_9 = arith.constant 0 : index
    %c2 = arith.constant 2 : index
    %17 = vector.load %arg2[%c0_9, %c2] : memref<64x5xf32, #tpu.memory_space<vmem>>, vector<64x1xf32>
    %c2_10 = arith.constant 2 : index
    %c0_11 = arith.constant 0 : index
    %18 = vector.load %arg3[%c2_10, %c0_11] : memref<6x64xf32, #tpu.memory_space<vmem>>, vector<1x64xf32>
    %cst_12 = arith.constant dense<0.000000e+00> : vector<16x1xf32>
    %19 = tpu.matmul %16, %17, %cst_12 {dimension_numbers = #tpu.dot_dimension_numbers<[1], [0], [0], [1], [0, 0, 1, 1], [], []>} : vector<16x64xf32>, vector<64x1xf32>, vector<16x1xf32> -> vector<16x1xf32>
    %20 = vector.broadcast %19 : vector<16x1xf32> to vector<16x64xf32>
    %21 = arith.mulf %0, %20 : vector<16x64xf32>
    %22 = vector.broadcast %18 : vector<1x64xf32> to vector<16x64xf32>
    %23 = arith.addf %21, %22 : vector<16x64xf32>
    %24 = arith.addf %23, %16 : vector<16x64xf32>
    %25 = arith.truncf %0 : vector<16x64xf32> to vector<16x64xbf16>
    %c0_13 = arith.constant 0 : index
    %c0_14 = arith.constant 0 : index
    %26 = vector.load %arg4[%c0_13, %c0_14] : memref<64x64xbf16, #tpu.memory_space<vmem>>, vector<64x64xbf16>
    %c3 = arith.constant 3 : index
    %c0_15 = arith.constant 0 : index
    %27 = vector.load %arg3[%c3, %c0_15] : memref<6x64xf32, #tpu.memory_space<vmem>>, vector<1x64xf32>
    %cst_16 = arith.constant dense<0.000000e+00> : vector<16x64xf32>
    %28 = tpu.matmul %25, %26, %cst_16 {dimension_numbers = #tpu.dot_dimension_numbers<[1], [0], [0], [1], [0, 0, 1, 1], [], []>} : vector<16x64xbf16>, vector<64x64xbf16>, vector<16x64xf32> -> vector<16x64xf32>
    %29 = vector.broadcast %27 : vector<1x64xf32> to vector<16x64xf32>
    %30 = arith.addf %28, %29 : vector<16x64xf32>
    %cst_17 = arith.constant 0.000000e+00 : f32
    %31 = vector.broadcast %cst_17 : f32 to vector<16x64xf32>
    %32 = arith.maximumf %30, %31 : vector<16x64xf32>
    %33 = arith.truncf %32 : vector<16x64xf32> to vector<16x64xbf16>
    %c0_18 = arith.constant 0 : index
    %c0_19 = arith.constant 0 : index
    %34 = vector.load %arg5[%c0_18, %c0_19] : memref<64x32xbf16, #tpu.memory_space<vmem>>, vector<64x32xbf16>
    %c4 = arith.constant 4 : index
    %c0_20 = arith.constant 0 : index
    %35 = vector.load %arg3[%c4, %c0_20] : memref<6x64xf32, #tpu.memory_space<vmem>>, vector<1x32xf32>
    %cst_21 = arith.constant dense<0.000000e+00> : vector<16x32xf32>
    %36 = tpu.matmul %33, %34, %cst_21 {dimension_numbers = #tpu.dot_dimension_numbers<[1], [0], [0], [1], [0, 0, 1, 1], [], []>} : vector<16x64xbf16>, vector<64x32xbf16>, vector<16x32xf32> -> vector<16x32xf32>
    %37 = vector.broadcast %35 : vector<1x32xf32> to vector<16x32xf32>
    %38 = arith.addf %36, %37 : vector<16x32xf32>
    %cst_22 = arith.constant 0.000000e+00 : f32
    %39 = vector.broadcast %cst_22 : f32 to vector<16x32xf32>
    %40 = arith.maximumf %38, %39 : vector<16x32xf32>
    %c0_23 = arith.constant 0 : index
    %c3_24 = arith.constant 3 : index
    %41 = vector.load %arg2[%c0_23, %c3_24] : memref<64x5xf32, #tpu.memory_space<vmem>>, vector<64x1xf32>
    %c0_25 = arith.constant 0 : index
    %c4_26 = arith.constant 4 : index
    %42 = vector.load %arg2[%c0_25, %c4_26] : memref<64x5xf32, #tpu.memory_space<vmem>>, vector<32x1xf32>
    %c5 = arith.constant 5 : index
    %c0_27 = arith.constant 0 : index
    %43 = vector.load %arg3[%c5, %c0_27] : memref<6x64xf32, #tpu.memory_space<vmem>>, vector<1x1xf32>
    %cst_28 = arith.constant dense<0.000000e+00> : vector<16x1xf32>
    %44 = tpu.matmul %24, %41, %cst_28 {dimension_numbers = #tpu.dot_dimension_numbers<[1], [0], [0], [1], [0, 0, 1, 1], [], []>} : vector<16x64xf32>, vector<64x1xf32>, vector<16x1xf32> -> vector<16x1xf32>
    %cst_29 = arith.constant dense<0.000000e+00> : vector<16x1xf32>
    %45 = tpu.matmul %40, %42, %cst_29 {dimension_numbers = #tpu.dot_dimension_numbers<[1], [0], [0], [1], [0, 0, 1, 1], [], []>} : vector<16x32xf32>, vector<32x1xf32>, vector<16x1xf32> -> vector<16x1xf32>
    %46 = arith.addf %44, %45 : vector<16x1xf32>
    %47 = vector.broadcast %43 : vector<1x1xf32> to vector<16x1xf32>
    %48 = arith.addf %46, %47 : vector<16x1xf32>
    %c0_30 = arith.constant 0 : index
    %c0_31 = arith.constant 0 : index
    %49 = vector.load %arg6[%c0_30, %c0_31] : memref<16x1xf32, #tpu.memory_space<vmem>>, vector<16x1xf32>
    tpu.vector_store %arg6[%c0_30, %c0_31], %48 {strides = array<i32>} : memref<16x1xf32, #tpu.memory_space<vmem>>, vector<16x1xf32>,
    return
  }
  func.func @transform_0(%arg0: i32) -> (i32, i32) {
    %c0_i32 = arith.constant 0 : i32
    %c0_i32_0 = arith.constant 0 : i32
    return %arg0, %c0_i32 : i32, i32
  }
  func.func @transform_1(%arg0: i32) -> (i32, i32) {
    %c0_i32 = arith.constant 0 : i32
    %c0_i32_0 = arith.constant 0 : i32
    %c0_i32_1 = arith.constant 0 : i32
    return %c0_i32, %c0_i32_0 : i32, i32
  }
  func.func @transform_2(%arg0: i32) -> (i32, i32) {
    %c0_i32 = arith.constant 0 : i32
    %c0_i32_0 = arith.constant 0 : i32
    %c0_i32_1 = arith.constant 0 : i32
    return %c0_i32, %c0_i32_0 : i32, i32
  }
  func.func @transform_3(%arg0: i32) -> (i32, i32) {
    %c0_i32 = arith.constant 0 : i32
    %c0_i32_0 = arith.constant 0 : i32
    %c0_i32_1 = arith.constant 0 : i32
    return %c0_i32, %c0_i32_0 : i32, i32
  }
  func.func @transform_4(%arg0: i32) -> (i32, i32) {
    %c0_i32 = arith.constant 0 : i32
    %c0_i32_0 = arith.constant 0 : i32
    %c0_i32_1 = arith.constant 0 : i32
    return %c0_i32, %c0_i32_0 : i32, i32
  }
  func.func @transform_5(%arg0: i32) -> (i32, i32) {
    %c0_i32 = arith.constant 0 : i32
    %c0_i32_0 = arith.constant 0 : i32
    return %arg0, %c0_i32 : i32, i32
  }
}

</mosaic_0001>

<llo_original>
// kernel: tpu_custom_call.1
$region0: #{tpu_custom_call.1}
  #allocation0 [shape = 'u32[]', space=smem, size = 0x4, offset = 0x4, fixed_abs, tag = 'smem constant byte address 0x4 - core index']
  #allocation1 [shape = 'u32[144,128]{1,0:T(1,128)}', space=vmem, size = 0x12000, scoped, tag = 'internal scratch']
  %s0 = inlined_call_operand.vmem [shape: f32[96,64], index: 0, kind: input, shape index: {}]
  %s1 = inlined_call_operand.vmem [shape: f32[64,5], index: 1, kind: input, shape index: {}]
  %s2 = inlined_call_operand.vmem [shape: f32[6,64], index: 2, kind: input, shape index: {}]
  %s3 = inlined_call_operand.vmem [shape: bf16[64,64], index: 3, kind: input, shape index: {}]
  %s4 = inlined_call_operand.vmem [shape: bf16[64,32], index: 4, kind: input, shape index: {}]
  %s5 = inlined_call_operand.vmem [shape: f32[96,1], index: 5, kind: output, shape index: {}]
  %s6 = sld [smem:[#allocation0]]
  $region53: #{tpu_custom_call.1} parent=0
    _
  %s8 = ssub.s32 1, %s6
  %s9 = scalar_select 0, %s8, %s6
  loop: start=0, step=1, limit=8
  $region2: #{tpu_custom_call.1} parent=0 // loop_pre_header
    _
  $region3: #{tpu_custom_call.1} parent=0 // loop_header
    %s11 = sphi 0, %s15
    %p12 = scmp.ge.s32.totalorder %s11, 8
    %s21 = sphi 0, %s23
    %s24 = sphi 0, %s21
    %s25 = sphi 0, %s24
    %s41 = sphi 0, %s25
    %s45 = sphi 0, %s45
    %s47 = sphi 0, %s45
    %s48 = sphi 0, %s47
    %s62 = sphi 0, %s48
    %s66 = sphi 0, %s66
    %s68 = sphi 0, %s66
    %s69 = sphi 0, %s68
    %s83 = sphi 0, %s69
    %s87 = sphi 0, %s87
    %s89 = sphi 0, %s87
    %s90 = sphi 0, %s89
    %s104 = sphi 0, %s90
    %s108 = sphi 0, %s108
    %s110 = sphi 0, %s108
    %s111 = sphi 0, %s110
    %s125 = sphi 0, %s111
    %s131 = sphi 0, %s133
    %s134 = sphi 0, %s131
    %s135 = sphi 0, %s134
    %s151 = sphi 0, %s135
  $region4: #{tpu_custom_call.1} parent=0 // loop_header_branch
    %14 = sbr.rel (%p12) target = $region8
  $region5: #{tpu_custom_call.1} parent=0 // loop_body
    %s16 = ssub.s32 %s11, 1
    %s17 = ssub.s32 %s11, 2
    %s18 = sadd.s32 %s11, 1
    %s19 = ssub.s32 %s11, %s18
    %p20 = scmp.eq.s32.totalorder %s19, 0
    %s22 = sadd.s32 %s21, 1
    %s23 = scalar_select %p20, %s21, %s22
    %p26 = pneg %p20
    %p27 = scmp.eq.s32.totalorder %s11, 5
    %p28 = por %p26, %p27
    %p29 = scmp.ne.s32.totalorder %s21, %s24
    %p30 = scmp.eq.s32.totalorder %s11, 0
    %p31 = por %p29, %p30
    %p32 = scmp.ne.s32.totalorder %s21, %s24
    %p33 = scmp.eq.s32.totalorder %s16, 5
    %p34 = por %p32, %p33
    %p35 = scmp.ne.s32.totalorder %s24, %s25
    %p36 = scmp.eq.s32.totalorder %s16, 0
    %p37 = por %p35, %p36
    %p38 = scmp.ne.s32.totalorder %s24, %s25
    %p39 = scmp.eq.s32.totalorder %s17, 5
    %p40 = por %p38, %p39
    %p42 = scmp.ne.s32.totalorder %s25, %s41
    %p43 = scmp.eq.s32.totalorder %s17, 0
    %p44 = por %p42, %p43
    %s46 = sadd.s32 %s45, 1
    %p49 = scmp.eq.s32.totalorder %s11, 5
    %p50 = scmp.ne.s32.totalorder %s45, %s47
    %p51 = scmp.eq.s32.totalorder %s11, 0
    %p52 = por %p50, %p51
    %p53 = scmp.ne.s32.totalorder %s45, %s47
    %p54 = scmp.eq.s32.totalorder %s16, 5
    %p55 = por %p53, %p54
    %p56 = scmp.ne.s32.totalorder %s47, %s48
    %p57 = scmp.eq.s32.totalorder %s16, 0
    %p58 = por %p56, %p57
    %p59 = scmp.ne.s32.totalorder %s47, %s48
    %p60 = scmp.eq.s32.totalorder %s17, 5
    %p61 = por %p59, %p60
    %p63 = scmp.ne.s32.totalorder %s48, %s62
    %p64 = scmp.eq.s32.totalorder %s17, 0
    %p65 = por %p63, %p64
    %s67 = sadd.s32 %s66, 1
    %p70 = scmp.eq.s32.totalorder %s11, 5
    %p71 = scmp.ne.s32.totalorder %s66, %s68
    %p72 = scmp.eq.s32.totalorder %s11, 0
    %p73 = por %p71, %p72
    %p74 = scmp.ne.s32.totalorder %s66, %s68
    %p75 = scmp.eq.s32.totalorder %s16, 5
    %p76 = por %p74, %p75
    %p77 = scmp.ne.s32.totalorder %s68, %s69
    %p78 = scmp.eq.s32.totalorder %s16, 0
    %p79 = por %p77, %p78
    %p80 = scmp.ne.s32.totalorder %s68, %s69
    %p81 = scmp.eq.s32.totalorder %s17, 5
    %p82 = por %p80, %p81
    %p84 = scmp.ne.s32.totalorder %s69, %s83
    %p85 = scmp.eq.s32.totalorder %s17, 0
    %p86 = por %p84, %p85
    %s88 = sadd.s32 %s87, 1
    %p91 = scmp.eq.s32.totalorder %s11, 5
    %p92 = scmp.ne.s32.totalorder %s87, %s89
    %p93 = scmp.eq.s32.totalorder %s11, 0
    %p94 = por %p92, %p93
    %p95 = scmp.ne.s32.totalorder %s87, %s89
    %p96 = scmp.eq.s32.totalorder %s16, 5
    %p97 = por %p95, %p96
    %p98 = scmp.ne.s32.totalorder %s89, %s90
    %p99 = scmp.eq.s32.totalorder %s16, 0
    %p100 = por %p98, %p99
    %p101 = scmp.ne.s32.totalorder %s89, %s90
    %p102 = scmp.eq.s32.totalorder %s17, 5
    %p103 = por %p101, %p102
    %p105 = scmp.ne.s32.totalorder %s90, %s104
    %p106 = scmp.eq.s32.totalorder %s17, 0
    %p107 = por %p105, %p106
    %s109 = sadd.s32 %s108, 1
    %p112 = scmp.eq.s32.totalorder %s11, 5
    %p113 = scmp.ne.s32.totalorder %s108, %s110
    %p114 = scmp.eq.s32.totalorder %s11, 0
    %p115 = por %p113, %p114
    %p116 = scmp.ne.s32.totalorder %s108, %s110
    %p117 = scmp.eq.s32.totalorder %s16, 5
    %p118 = por %p116, %p117
    %p119 = scmp.ne.s32.totalorder %s110, %s111
    %p120 = scmp.eq.s32.totalorder %s16, 0
    %p121 = por %p119, %p120
    %p122 = scmp.ne.s32.totalorder %s110, %s111
    %p123 = scmp.eq.s32.totalorder %s17, 5
    %p124 = por %p122, %p123
    %p126 = scmp.ne.s32.totalorder %s111, %s125
    %p127 = scmp.eq.s32.totalorder %s17, 0
    %p128 = por %p126, %p127
    %s129 = ssub.s32 %s11, %s18
    %p130 = scmp.eq.s32.totalorder %s129, 0
    %s132 = sadd.s32 %s131, 1
    %s133 = scalar_select %p130, %s131, %s132
    %p136 = pneg %p130
    %p137 = scmp.eq.s32.totalorder %s11, 5
    %p138 = por %p136, %p137
    %p139 = scmp.ne.s32.totalorder %s131, %s134
    %p140 = scmp.eq.s32.totalorder %s11, 0
    %p141 = por %p139, %p140
    %p142 = scmp.ne.s32.totalorder %s131, %s134
    %p143 = scmp.eq.s32.totalorder %s16, 5
    %p144 = por %p142, %p143
    %p145 = scmp.ne.s32.totalorder %s134, %s135
    %p146 = scmp.eq.s32.totalorder %s16, 0
    %p147 = por %p145, %p146
    %p148 = scmp.ne.s32.totalorder %s134, %s135
    %p149 = scmp.eq.s32.totalorder %s17, 5
    %p150 = por %p148, %p149
    %p152 = scmp.ne.s32.totalorder %s135, %s151
    %p153 = scmp.eq.s32.totalorder %s17, 0
    %p154 = por %p152, %p153
    %p155 = scmp.le.s32.totalorder 1, %s11
    %p156 = scmp.lt.s32.totalorder %s11, 7
    %p157 = pnand %p155, %p156
    %p158 = pneg %p157
    // Predicated region
    $region9: #{tpu_custom_call.1} parent=5 // pred_check
      _
    $region10: #{tpu_custom_call.1} parent=5 // pred_check_branch
      %160 = sbr.rel (%p157) target = $region12
    $region11: #{tpu_custom_call.1} parent=5 // pred_region
      %s161 = ssub.s32 %s11, 1
      // Predicated region
      $region13: #{tpu_custom_call.1} parent=11 // pred_check
        %p162 = pneg %p58
      $region14: #{tpu_custom_call.1} parent=11 // pred_check_branch
        %164 = sbr.rel (%p162) target = $region16
      $region15: #{tpu_custom_call.1} parent=11 // pred_region
        _
      $region16: #{tpu_custom_call.1} parent=11 // pred_fallthru
        _
      // Predicated region
      $region17: #{tpu_custom_call.1} parent=11 // pred_check
        %p165 = pneg %p79
      $region18: #{tpu_custom_call.1} parent=11 // pred_check_branch
        %167 = sbr.rel (%p165) target = $region20
      $region19: #{tpu_custom_call.1} parent=11 // pred_region
        _
      $region20: #{tpu_custom_call.1} parent=11 // pred_fallthru
        _
      // Predicated region
      $region21: #{tpu_custom_call.1} parent=11 // pred_check
        %p168 = pneg %p100
      $region22: #{tpu_custom_call.1} parent=11 // pred_check_branch
        %170 = sbr.rel (%p168) target = $region24
      $region23: #{tpu_custom_call.1} parent=11 // pred_region
        _
      $region24: #{tpu_custom_call.1} parent=11 // pred_fallthru
        _
      // Predicated region
      $region25: #{tpu_custom_call.1} parent=11 // pred_check
        %p171 = pneg %p121
      $region26: #{tpu_custom_call.1} parent=11 // pred_check_branch
        %173 = sbr.rel (%p171) target = $region28
      $region27: #{tpu_custom_call.1} parent=11 // pred_region
        _
      $region28: #{tpu_custom_call.1} parent=11 // pred_fallthru
        _
    $region12: #{tpu_custom_call.1} parent=5 // pred_fallthru
      _
    %p174 = scmp.lt.s32.totalorder %s11, 6
    // Predicated region
    $region29: #{tpu_custom_call.1} parent=5 // pred_check
      %p175 = pneg %p174
    $region30: #{tpu_custom_call.1} parent=5 // pred_check_branch
      %177 = sbr.rel (%p175) target = $region32
    $region31: #{tpu_custom_call.1} parent=5 // pred_region
      // Predicated region
      $region33: #{tpu_custom_call.1} parent=31 // pred_check
        %p178 = pneg %p31
      $region34: #{tpu_custom_call.1} parent=31 // pred_check_branch
        %180 = sbr.rel (%p178) target = $region36
      $region35: #{tpu_custom_call.1} parent=31 // pred_region
        %s181 = smul.u32 2, %s11
        %p182 = scmp.lt.s32.totalorder %s181, 11
        %s183 = scalar_select %p182, %s181, 11
        %s184 = smul.addr %s183, 8
        %s185 = scalar_lea.vmem %s0, %s184
        %s186 = smul.u32 2, %s11
      $region36: #{tpu_custom_call.1} parent=31 // pred_fallthru
        _
    $region32: #{tpu_custom_call.1} parent=5 // pred_fallthru
      _
    %p187 = scmp.le.s32.totalorder 1, %s11
    %p188 = scmp.lt.s32.totalorder %s11, 7
    %p189 = pnand %p187, %p188
    %p190 = pneg %p189
    // Predicated region
    $region37: #{tpu_custom_call.1} parent=5 // pred_check
      _
    $region38: #{tpu_custom_call.1} parent=5 // pred_check_branch
      %192 = sbr.rel (%p189) target = $region40
    $region39: #{tpu_custom_call.1} parent=5 // pred_region
      %s193 = ssub.s32 %s11, 1
      %s194 = smul.u32 2, %s16
      %p195 = scmp.lt.s32.totalorder %s194, 11
      %s196 = scalar_select %p195, %s194, 11
      %s197 = smul.addr %s196, 8
      %s198 = scalar_lea.vmem %s0, %s197
      %p199 = pneg %p37
      %p200 = pneg %p34
      %p201 = pneg %p58
      %p202 = pneg %p55
      %p203 = pneg %p79
      %p204 = pneg %p76
      %p205 = pneg %p100
      %p206 = pneg %p97
      %p207 = pneg %p121
      %p208 = pneg %p118
      %p209 = pneg %p147
      %p210 = pneg %p144
      %s211 = smul.u32 2, %s16
      %p212 = scmp.lt.s32.totalorder %s211, 11
      %s213 = scalar_select %p212, %s211, 11
      %s214 = smul.addr %s213, 8
      %s215 = scalar_lea.vmem %s5, %s214
      %s216 = smul.u32 2, %s16
      %p217 = scmp.lt.s32.totalorder %s216, 11
      %s218 = scalar_select %p217, %s216, 11
      %s219 = smul.addr %s218, 8
      %s220 = scalar_lea.vmem %s0, %s219
      %s221 = smul.u32 2, %s16
      %s222 = smul.u32 2, %s16
      %p223 = scmp.lt.s32.totalorder %s222, 11
      %s224 = scalar_select %p223, %s222, 11
      %s225 = smul.addr %s224, 8
      %s226 = scalar_lea.vmem %s5, %s225
      %s227 = smul.u32 2, %s16
      %v229 = vld [vmem:[%s220] sm:$0xff]
      %v230 = vld [vmem:[%s220 + $0x8] sm:$0xff]
      %v231 = vld [vmem:[%s1] sm:$0xff]
      %v232 = vld [vmem:[%s1 + $0x8] sm:$0xff]
      %v233 = vld [vmem:[%s1 + $0x10] sm:$0xff]
      %v234 = vld [vmem:[%s1 + $0x18] sm:$0xff]
      %v235 = vld [vmem:[%s1 + $0x20] sm:$0xff]
      %v236 = vld [vmem:[%s1 + $0x28] sm:$0xff]
      %v237 = vld [vmem:[%s1 + $0x30] sm:$0xff]
      %v238 = vld [vmem:[%s1 + $0x38] sm:$0xff]
      %v239 = vld [vmem:[%s2] sm:$0x1]
      %vm240 = vcmask 523264
      %v242 = vsel %vm240, %v229, 0
      %v245 = vsel %vm240, %v230, 0
      %247 = vmatprep.subr.mxu0 0.0
      %248 = vmatpush1.msra.mxu0 %v231
      %249 = vmatprep.subr.mxu0 0.0
      %250 = vmatpush1.msra.mxu0 %v232
      %251 = vmatprep.subr.mxu0 0.0
      %252 = vmatpush1.msra.mxu0 %v233
      %253 = vmatprep.subr.mxu0 0.0
      %254 = vmatpush1.msra.mxu0 %v234
      %255 = vmatprep.subr.mxu0 0.0
      %256 = vmatpush1.msra.mxu0 %v235
      %257 = vmatprep.subr.mxu0 0.0
      %258 = vmatpush1.msra.mxu0 %v236
      %259 = vmatprep.subr.mxu0 0.0
      %260 = vmatpush1.msra.mxu0 %v237
      %261 = vmatprep.subr.mxu0 0.0
      %262 = vmatpush1.msra.mxu0 %v238
      %263 = vmatprep.subr.mxu0 0.0
      %264 = vmatpush1.msra.mxu0 0.0
      %265 = vmatprep.subr.mxu0 0.0
      %266 = vmatpush1.msra.mxu0 0.0
      %267 = vmatprep.subr.mxu0 0.0
      %268 = vmatpush1.msra.mxu0 0.0
      %269 = vmatprep.subr.mxu0 0.0
      %270 = vmatpush1.msra.mxu0 0.0
      %271 = vmatprep.subr.mxu0 0.0
      %272 = vmatpush1.msra.mxu0 0.0
      %273 = vmatprep.subr.mxu0 0.0
      %274 = vmatpush1.msra.mxu0 0.0
      %275 = vmatprep.subr.mxu0 0.0
      %276 = vmatpush1.msra.mxu0 0.0
      %277 = vmatprep.subr.mxu0 0.0
      %278 = vmatpush1.msra.mxu0 0.0
      %279 = vmatprep.subr.mxu0 0.0
      %280 = vmatpush1.msra.mxu0 0.0
      %281 = vmatprep.subr.mxu0 0.0
      %282 = vmatpush1.msra.mxu0 0.0
      %283 = vmatprep.subr.mxu0 0.0
      %284 = vmatpush1.msra.mxu0 0.0
      %285 = vmatprep.subr.mxu0 0.0
      %286 = vmatpush1.msra.mxu0 0.0
      %287 = vmatprep.subr.mxu0 0.0
      %288 = vmatpush1.msra.mxu0 0.0
      %289 = vmatprep.subr.mxu0 0.0
      %290 = vmatpush1.msra.mxu0 0.0
      %291 = vmatprep.subr.mxu0 0.0
      %292 = vmatpush1.msra.mxu0 0.0
      %293 = vmatprep.subr.mxu0 0.0
      %294 = vmatpush1.msra.mxu0 0.0
      %295 = vmatprep.subr.mxu0 0.0
      %296 = vmatpush1.msra.mxu0 0.0
      %297 = vmatprep.subr.mxu0 0.0
      %298 = vmatpush1.msra.mxu0 0.0
      %299 = vmatprep.subr.mxu0 0.0
      %300 = vmatpush1.msra.mxu0 0.0
      %301 = vmatprep.subr.mxu0 0.0
      %302 = vmatpush1.msra.mxu0 0.0
      %303 = vmatprep.subr.mxu0 0.0
      %304 = vmatpush1.msra.mxu0 0.0
      %305 = vmatprep.subr.mxu0 0.0
      %306 = vmatpush1.msra.mxu0 0.0
      %307 = vmatprep.subr.mxu0 0.0
      %308 = vmatpush1.msra.mxu0 0.0
      %309 = vmatprep.subr.mxu0 0.0
      %310 = vmatpush1.msra.mxu0 0.0
      %311 = vmatprep.mubr.f32.mxu0 0.0
      %312 = vmatmul.mubr.f32.gmra.mrb[0].mxu0 %v242
      %v313 = vpop.f32.mrb[0].mxu0
      %v314 = vadd.f32 0.0, %v313
      %v315 = vpop.f32.mrb[0].mxu0
      %316 = vmatprep.mubr.f32.mxu0 0.0
      %317 = vmatmul.mubr.f32.gmra.mrb[0].mxu0 %v245
      %v318 = vpop.f32.mrb[0].mxu0
      %v319 = vadd.f32 0.0, %v318
      %v320 = vpop.f32.mrb[0].mxu0
      %321 = vdwg.mxu0
      %323 = vset.pattern.permute.xlu0 0
      %324 = vperm.xlu0 %323, %v314
      %v325 = vpop.permute.xlu0 %324
      %328 = vset.pattern.permute.xlu0 0
      %329 = vperm.xlu0 %328, %v319
      %v330 = vpop.permute.xlu0 %329
      %v332 = vmul.f32 %v229, %v325
      %v333 = vmul.f32 %v230, %v330
      %v334 = vlaneseq
      %v335 = vshrl.u32 %v334, 7
      %v336 = vsub.s32 0, %v335
      %v337 = vrot.slane %v239, %v336
      %v338 = vadd.f32 %v332, %v337
      %v339 = vadd.f32 %v333, %v337
      %v340 = vadd.f32 %v338, %v229
      %v341 = vadd.f32 %v339, %v230
      %v342 = vld [vmem:[%s2 + $0x1] sm:$0x1]
      %351 = vrot.lane.b32.xlu0 %v231, 127
      %v352 = vpop.permute.xlu0 %351
      %353 = vrot.lane.b32.xlu0 %v232, 127
      %v354 = vpop.permute.xlu0 %353
      %355 = vrot.lane.b32.xlu0 %v233, 127
      %v356 = vpop.permute.xlu0 %355
      %357 = vrot.lane.b32.xlu0 %v234, 127
      %v358 = vpop.permute.xlu0 %357
      %359 = vrot.lane.b32.xlu0 %v235, 127
      %v360 = vpop.permute.xlu0 %359
      %361 = vrot.lane.b32.xlu0 %v236, 127
      %v362 = vpop.permute.xlu0 %361
      %363 = vrot.lane.b32.xlu0 %v237, 127
      %v364 = vpop.permute.xlu0 %363
      %365 = vrot.lane.b32.xlu0 %v238, 127
      %v366 = vpop.permute.xlu0 %365
      %v376 = vsel %vm240, %v340, 0
      %v379 = vsel %vm240, %v341, 0
      %381 = vmatprep.subr.mxu0 0.0
      %382 = vmatpush1.msra.mxu0 %v352
      %383 = vmatprep.subr.mxu0 0.0
      %384 = vmatpush1.msra.mxu0 %v354
      %385 = vmatprep.subr.mxu0 0.0
      %386 = vmatpush1.msra.mxu0 %v356
      %387 = vmatprep.subr.mxu0 0.0
      %388 = vmatpush1.msra.mxu0 %v358
      %389 = vmatprep.subr.mxu0 0.0
      %390 = vmatpush1.msra.mxu0 %v360
      %391 = vmatprep.subr.mxu0 0.0
      %392 = vmatpush1.msra.mxu0 %v362
      %393 = vmatprep.subr.mxu0 0.0
      %394 = vmatpush1.msra.mxu0 %v364
      %395 = vmatprep.subr.mxu0 0.0
      %396 = vmatpush1.msra.mxu0 %v366
      %397 = vmatprep.subr.mxu0 0.0
      %398 = vmatpush1.msra.mxu0 0.0
      %399 = vmatprep.subr.mxu0 0.0
      %400 = vmatpush1.msra.mxu0 0.0
      %401 = vmatprep.subr.mxu0 0.0
      %402 = vmatpush1.msra.mxu0 0.0
      %403 = vmatprep.subr.mxu0 0.0
      %404 = vmatpush1.msra.mxu0 0.0
      %405 = vmatprep.subr.mxu0 0.0
      %406 = vmatpush1.msra.mxu0 0.0
      %407 = vmatprep.subr.mxu0 0.0
      %408 = vmatpush1.msra.mxu0 0.0
      %409 = vmatprep.subr.mxu0 0.0
      %410 = vmatpush1.msra.mxu0 0.0
      %411 = vmatprep.subr.mxu0 0.0
      %412 = vmatpush1.msra.mxu0 0.0
      %413 = vmatprep.subr.mxu0 0.0
      %414 = vmatpush1.msra.mxu0 0.0
      %415 = vmatprep.subr.mxu0 0.0
      %416 = vmatpush1.msra.mxu0 0.0
      %417 = vmatprep.subr.mxu0 0.0
      %418 = vmatpush1.msra.mxu0 0.0
      %419 = vmatprep.subr.mxu0 0.0
      %420 = vmatpush1.msra.mxu0 0.0
      %421 = vmatprep.subr.mxu0 0.0
      %422 = vmatpush1.msra.mxu0 0.0
      %423 = vmatprep.subr.mxu0 0.0
      %424 = vmatpush1.msra.mxu0 0.0
      %425 = vmatprep.subr.mxu0 0.0
      %426 = vmatpush1.msra.mxu0 0.0
      %427 = vmatprep.subr.mxu0 0.0
      %428 = vmatpush1.msra.mxu0 0.0
      %429 = vmatprep.subr.mxu0 0.0
      %430 = vmatpush1.msra.mxu0 0.0
      %431 = vmatprep.subr.mxu0 0.0
      %432 = vmatpush1.msra.mxu0 0.0
      %433 = vmatprep.subr.mxu0 0.0
      %434 = vmatpush1.msra.mxu0 0.0
      %435 = vmatprep.subr.mxu0 0.0
      %436 = vmatpush1.msra.mxu0 0.0
      %437 = vmatprep.subr.mxu0 0.0
      %438 = vmatpush1.msra.mxu0 0.0
      %439 = vmatprep.subr.mxu0 0.0
      %440 = vmatpush1.msra.mxu0 0.0
      %441 = vmatprep.subr.mxu0 0.0
      %442 = vmatpush1.msra.mxu0 0.0
      %443 = vmatprep.subr.mxu0 0.0
      %444 = vmatpush1.msra.mxu0 0.0
      %445 = vmatprep.mubr.f32.mxu0 0.0
      %446 = vmatmul.mubr.f32.gmra.mrb[0].mxu0 %v376
      %v447 = vpop.f32.mrb[0].mxu0
      %v448 = vadd.f32 0.0, %v447
      %v449 = vpop.f32.mrb[0].mxu0
      %450 = vmatprep.mubr.f32.mxu0 0.0
      %451 = vmatmul.mubr.f32.gmra.mrb[0].mxu0 %v379
      %v452 = vpop.f32.mrb[0].mxu0
      %v453 = vadd.f32 0.0, %v452
      %v454 = vpop.f32.mrb[0].mxu0
      %455 = vdwg.mxu0
      %457 = vset.pattern.permute.xlu0 0
      %458 = vperm.xlu0 %457, %v448
      %v459 = vpop.permute.xlu0 %458
      %462 = vset.pattern.permute.xlu0 0
      %463 = vperm.xlu0 %462, %v453
      %v464 = vpop.permute.xlu0 %463
      %v466 = vmul.f32 %v229, %v459
      %v467 = vmul.f32 %v230, %v464
      %v468 = vlaneseq
      %v469 = vshrl.u32 %v468, 7
      %v470 = vsub.s32 0, %v469
      %v471 = vrot.slane %v342, %v470
      %v472 = vadd.f32 %v466, %v471
      %v473 = vadd.f32 %v467, %v471
      %v474 = vadd.f32 %v472, %v340
      %v475 = vadd.f32 %v473, %v341
      %v476 = vld [vmem:[%s2 + $0x2] sm:$0x1]
      %477 = vrot.lane.b32.xlu0 %v231, 126
      %v478 = vpop.permute.xlu0 %477
      %479 = vrot.lane.b32.xlu0 %v232, 126
      %v480 = vpop.permute.xlu0 %479
      %481 = vrot.lane.b32.xlu0 %v233, 126
      %v482 = vpop.permute.xlu0 %481
      %483 = vrot.lane.b32.xlu0 %v234, 126
      %v484 = vpop.permute.xlu0 %483
      %485 = vrot.lane.b32.xlu0 %v235, 126
      %v486 = vpop.permute.xlu0 %485
      %487 = vrot.lane.b32.xlu0 %v236, 126
      %v488 = vpop.permute.xlu0 %487
      %489 = vrot.lane.b32.xlu0 %v237, 126
      %v490 = vpop.permute.xlu0 %489
      %491 = vrot.lane.b32.xlu0 %v238, 126
      %v492 = vpop.permute.xlu0 %491
      %v502 = vsel %vm240, %v474, 0
      %v505 = vsel %vm240, %v475, 0
      %507 = vmatprep.subr.mxu0 0.0
      %508 = vmatpush1.msra.mxu0 %v478
      %509 = vmatprep.subr.mxu0 0.0
      %510 = vmatpush1.msra.mxu0 %v480
      %511 = vmatprep.subr.mxu0 0.0
      %512 = vmatpush1.msra.mxu0 %v482
      %513 = vmatprep.subr.mxu0 0.0
      %514 = vmatpush1.msra.mxu0 %v484
      %515 = vmatprep.subr.mxu0 0.0
      %516 = vmatpush1.msra.mxu0 %v486
      %517 = vmatprep.subr.mxu0 0.0
      %518 = vmatpush1.msra.mxu0 %v488
      %519 = vmatprep.subr.mxu0 0.0
      %520 = vmatpush1.msra.mxu0 %v490
      %521 = vmatprep.subr.mxu0 0.0
      %522 = vmatpush1.msra.mxu0 %v492
      %523 = vmatprep.subr.mxu0 0.0
      %524 = vmatpush1.msra.mxu0 0.0
      %525 = vmatprep.subr.mxu0 0.0
      %526 = vmatpush1.msra.mxu0 0.0
      %527 = vmatprep.subr.mxu0 0.0
      %528 = vmatpush1.msra.mxu0 0.0
      %529 = vmatprep.subr.mxu0 0.0
      %530 = vmatpush1.msra.mxu0 0.0
      %531 = vmatprep.subr.mxu0 0.0
      %532 = vmatpush1.msra.mxu0 0.0
      %533 = vmatprep.subr.mxu0 0.0
      %534 = vmatpush1.msra.mxu0 0.0
      %535 = vmatprep.subr.mxu0 0.0
      %536 = vmatpush1.msra.mxu0 0.0
      %537 = vmatprep.subr.mxu0 0.0
      %538 = vmatpush1.msra.mxu0 0.0
      %539 = vmatprep.subr.mxu0 0.0
      %540 = vmatpush1.msra.mxu0 0.0
      %541 = vmatprep.subr.mxu0 0.0
      %542 = vmatpush1.msra.mxu0 0.0
      %543 = vmatprep.subr.mxu0 0.0
      %544 = vmatpush1.msra.mxu0 0.0
      %545 = vmatprep.subr.mxu0 0.0
      %546 = vmatpush1.msra.mxu0 0.0
      %547 = vmatprep.subr.mxu0 0.0
      %548 = vmatpush1.msra.mxu0 0.0
      %549 = vmatprep.subr.mxu0 0.0
      %550 = vmatpush1.msra.mxu0 0.0
      %551 = vmatprep.subr.mxu0 0.0
      %552 = vmatpush1.msra.mxu0 0.0
      %553 = vmatprep.subr.mxu0 0.0
      %554 = vmatpush1.msra.mxu0 0.0
      %555 = vmatprep.subr.mxu0 0.0
      %556 = vmatpush1.msra.mxu0 0.0
      %557 = vmatprep.subr.mxu0 0.0
      %558 = vmatpush1.msra.mxu0 0.0
      %559 = vmatprep.subr.mxu0 0.0
      %560 = vmatpush1.msra.mxu0 0.0
      %561 = vmatprep.subr.mxu0 0.0
      %562 = vmatpush1.msra.mxu0 0.0
      %563 = vmatprep.subr.mxu0 0.0
      %564 = vmatpush1.msra.mxu0 0.0
      %565 = vmatprep.subr.mxu0 0.0
      %566 = vmatpush1.msra.mxu0 0.0
      %567 = vmatprep.subr.mxu0 0.0
      %568 = vmatpush1.msra.mxu0 0.0
      %569 = vmatprep.subr.mxu0 0.0
      %570 = vmatpush1.msra.mxu0 0.0
      %571 = vmatprep.mubr.f32.mxu0 0.0
      %572 = vmatmul.mubr.f32.gmra.mrb[0].mxu0 %v502
      %v573 = vpop.f32.mrb[0].mxu0
      %v574 = vadd.f32 0.0, %v573
      %v575 = vpop.f32.mrb[0].mxu0
      %576 = vmatprep.mubr.f32.mxu0 0.0
      %577 = vmatmul.mubr.f32.gmra.mrb[0].mxu0 %v505
      %v578 = vpop.f32.mrb[0].mxu0
      %v579 = vadd.f32 0.0, %v578
      %v580 = vpop.f32.mrb[0].mxu0
      %581 = vdwg.mxu0
      %583 = vset.pattern.permute.xlu0 0
      %584 = vperm.xlu0 %583, %v574
      %v585 = vpop.permute.xlu0 %584
      %588 = vset.pattern.permute.xlu0 0
      %589 = vperm.xlu0 %588, %v579
      %v590 = vpop.permute.xlu0 %589
      %v592 = vmul.f32 %v229, %v585
      %v593 = vmul.f32 %v230, %v590
      %v594 = vlaneseq
      %v595 = vshrl.u32 %v594, 7
      %v596 = vsub.s32 0, %v595
      %v597 = vrot.slane %v476, %v596
      %v598 = vadd.f32 %v592, %v597
      %v599 = vadd.f32 %v593, %v597
      %v600 = vadd.f32 %v598, %v474
      %v601 = vadd.f32 %v599, %v475
      %v602 = vpack.c.bf16 %v230, %v229
      %v603 = vld [vmem:[%s3] sm:$0xf]
      %v604 = vld [vmem:[%s3 + $0x4] sm:$0xf]
      %v605 = vld [vmem:[%s3 + $0x8] sm:$0xf]
      %v606 = vld [vmem:[%s3 + $0xc] sm:$0xf]
      %v607 = vld [vmem:[%s3 + $0x10] sm:$0xf]
      %v608 = vld [vmem:[%s3 + $0x14] sm:$0xf]
      %v609 = vld [vmem:[%s3 + $0x18] sm:$0xf]
      %v610 = vld [vmem:[%s3 + $0x1c] sm:$0xf]
      %v611 = vld [vmem:[%s2 + $0x3] sm:$0x1]
      %v612 = vlaneseq
      %v613 = vshrl.u32 %v612, 7
      %v614 = vsub.s32 0, %v613
      %v615 = vrot.slane %v611, %v614
      %v624 = vunpack.c.l.b16 %v603
      %v625 = vunpack.c.l.b16 %v604
      %v626 = vunpack.c.l.b16 %v605
      %v627 = vunpack.c.l.b16 %v606
      %v628 = vunpack.c.l.b16 %v607
      %v629 = vunpack.c.l.b16 %v608
      %v630 = vunpack.c.l.b16 %v609
      %v631 = vunpack.c.l.b16 %v610
      %v632 = vpack.c.b16 %v625, %v624
      %v633 = vpack.c.b16 %v627, %v626
      %v634 = vpack.c.b16 %v629, %v628
      %v635 = vpack.c.b16 %v631, %v630
      %v641 = vsel %vm240, %v602, 0
      %643 = vmatprep.subr.bf16.mxu0 0
      %644 = vmatpush1.bf16.msra.mxu0 %v632
      %645 = vmatprep.subr.bf16.mxu0 0
      %646 = vmatpush1.bf16.msra.mxu0 %v633
      %647 = vmatprep.subr.bf16.mxu0 0
      %648 = vmatpush1.bf16.msra.mxu0 %v634
      %649 = vmatprep.subr.bf16.mxu0 0
      %650 = vmatpush1.bf16.msra.mxu0 %v635
      %651 = vmatprep.subr.bf16.mxu0 0
      %652 = vmatpush1.bf16.msra.mxu0 0
      %653 = vmatprep.subr.bf16.mxu0 0
      %654 = vmatpush1.bf16.msra.mxu0 0
      %655 = vmatprep.subr.bf16.mxu0 0
      %656 = vmatpush1.bf16.msra.mxu0 0
      %657 = vmatprep.subr.bf16.mxu0 0
      %658 = vmatpush1.bf16.msra.mxu0 0
      %659 = vmatprep.subr.bf16.mxu0 0
      %660 = vmatpush1.bf16.msra.mxu0 0
      %661 = vmatprep.subr.bf16.mxu0 0
      %662 = vmatpush1.bf16.msra.mxu0 0
      %663 = vmatprep.subr.bf16.mxu0 0
      %664 = vmatpush1.bf16.msra.mxu0 0
      %665 = vmatprep.subr.bf16.mxu0 0
      %666 = vmatpush1.bf16.msra.mxu0 0
      %667 = vmatprep.subr.bf16.mxu0 0
      %668 = vmatpush1.bf16.msra.mxu0 0
      %669 = vmatprep.subr.bf16.mxu0 0
      %670 = vmatpush1.bf16.msra.mxu0 0
      %671 = vmatprep.subr.bf16.mxu0 0
      %672 = vmatpush1.bf16.msra.mxu0 0
      %673 = vmatprep.subr.bf16.mxu0 0
      %674 = vmatpush1.bf16.msra.mxu0 0
      %675 = vmatprep.mubr.bf16.mxu0 0
      %676 = vmatmul.mubr.bf16.gmra.mrb[0].mxu0 %v641
      %v677 = vpop.f32.mrb[0].mxu0
      %v678 = vadd.f32 %v615, %v677
      %v679 = vpop.f32.mrb[0].mxu0
      %v680 = vpop.f32.mrb[0].mxu0
      %v681 = vadd.f32 %v615, %v680
      %v682 = vpop.f32.mrb[0].mxu0
      %683 = vdwg.mxu0
      %v684 = vmax.f32 %v678, 0.0
      %v685 = vmax.f32 %v681, 0.0
      %v686 = vpack.c.bf16 %v685, %v684
      %v687 = vld [vmem:[%s4] sm:$0xf]
      %v688 = vld [vmem:[%s4 + $0x4] sm:$0xf]
      %v689 = vld [vmem:[%s4 + $0x8] sm:$0xf]
      %v690 = vld [vmem:[%s4 + $0xc] sm:$0xf]
      %v691 = vld [vmem:[%s4 + $0x10] sm:$0xf]
      %v692 = vld [vmem:[%s4 + $0x14] sm:$0xf]
      %v693 = vld [vmem:[%s4 + $0x18] sm:$0xf]
      %v694 = vld [vmem:[%s4 + $0x1c] sm:$0xf]
      %v695 = vld [vmem:[%s2 + $0x4] sm:$0x1]
      %v696 = vlaneseq
      %v697 = vshrl.u32 %v696, 7
      %v698 = vsub.s32 0, %v697
      %v699 = vrot.slane %v695, %v698
      %v708 = vunpack.c.l.b16 %v687
      %v709 = vunpack.c.l.b16 %v688
      %v710 = vunpack.c.l.b16 %v689
      %v711 = vunpack.c.l.b16 %v690
      %v712 = vunpack.c.l.b16 %v691
      %v713 = vunpack.c.l.b16 %v692
      %v714 = vunpack.c.l.b16 %v693
      %v715 = vunpack.c.l.b16 %v694
      %v716 = vpack.c.b16 %v709, %v708
      %v717 = vpack.c.b16 %v711, %v710
      %v718 = vpack.c.b16 %v713, %v712
      %v719 = vpack.c.b16 %v715, %v714
      %v725 = vsel %vm240, %v686, 0
      %727 = vmatprep.subr.bf16.mxu0 0
      %728 = vmatpush1.bf16.msra.mxu0 %v716
      %729 = vmatprep.subr.bf16.mxu0 0
      %730 = vmatpush1.bf16.msra.mxu0 %v717
      %731 = vmatprep.subr.bf16.mxu0 0
      %732 = vmatpush1.bf16.msra.mxu0 %v718
      %733 = vmatprep.subr.bf16.mxu0 0
      %734 = vmatpush1.bf16.msra.mxu0 %v719
      %735 = vmatprep.subr.bf16.mxu0 0
      %736 = vmatpush1.bf16.msra.mxu0 0
      %737 = vmatprep.subr.bf16.mxu0 0
      %738 = vmatpush1.bf16.msra.mxu0 0
      %739 = vmatprep.subr.bf16.mxu0 0
      %740 = vmatpush1.bf16.msra.mxu0 0
      %741 = vmatprep.subr.bf16.mxu0 0
      %742 = vmatpush1.bf16.msra.mxu0 0
      %743 = vmatprep.subr.bf16.mxu0 0
      %744 = vmatpush1.bf16.msra.mxu0 0
      %745 = vmatprep.subr.bf16.mxu0 0
      %746 = vmatpush1.bf16.msra.mxu0 0
      %747 = vmatprep.subr.bf16.mxu0 0
      %748 = vmatpush1.bf16.msra.mxu0 0
      %749 = vmatprep.subr.bf16.mxu0 0
      %750 = vmatpush1.bf16.msra.mxu0 0
      %751 = vmatprep.subr.bf16.mxu0 0
      %752 = vmatpush1.bf16.msra.mxu0 0
      %753 = vmatprep.subr.bf16.mxu0 0
      %754 = vmatpush1.bf16.msra.mxu0 0
      %755 = vmatprep.subr.bf16.mxu0 0
      %756 = vmatpush1.bf16.msra.mxu0 0
      %757 = vmatprep.subr.bf16.mxu0 0
      %758 = vmatpush1.bf16.msra.mxu0 0
      %759 = vmatprep.mubr.bf16.mxu0 0
      %760 = vmatmul.mubr.bf16.gmra.mrb[0].mxu0 %v725
      %v761 = vpop.f32.mrb[0].mxu0
      %v762 = vadd.f32 %v699, %v761
      %v763 = vpop.f32.mrb[0].mxu0
      %v764 = vpop.f32.mrb[0].mxu0
      %v765 = vadd.f32 %v699, %v764
      %v766 = vpop.f32.mrb[0].mxu0
      %767 = vdwg.mxu0
      %v768 = vmax.f32 %v762, 0.0
      %v769 = vmax.f32 %v765, 0.0
      %v770 = vld [vmem:[%s1] sm:$0xff]
      %v771 = vld [vmem:[%s1 + $0x8] sm:$0xff]
      %v772 = vld [vmem:[%s1 + $0x10] sm:$0xff]
      %v773 = vld [vmem:[%s1 + $0x18] sm:$0xff]
      %v774 = vld [vmem:[%s2 + $0x5] sm:$0x1]
      %779 = vrot.lane.b32.xlu0 %v770, 124
      %v780 = vpop.permute.xlu0 %779
      %781 = vrot.lane.b32.xlu0 %v771, 124
      %v782 = vpop.permute.xlu0 %781
      %783 = vrot.lane.b32.xlu0 %v772, 124
      %v784 = vpop.permute.xlu0 %783
      %785 = vrot.lane.b32.xlu0 %v773, 124
      %v786 = vpop.permute.xlu0 %785
      %vm791 = vcmask 261120
      %v793 = vsel %vm791, %v768, 0
      %v796 = vsel %vm791, %v769, 0
      %798 = vmatprep.subr.mxu0 0.0
      %799 = vmatpush1.msra.mxu0 %v780
      %800 = vmatprep.subr.mxu0 0.0
      %801 = vmatpush1.msra.mxu0 %v782
      %802 = vmatprep.subr.mxu0 0.0
      %803 = vmatpush1.msra.mxu0 %v784
      %804 = vmatprep.subr.mxu0 0.0
      %805 = vmatpush1.msra.mxu0 %v786
      %806 = vmatprep.subr.mxu0 0.0
      %807 = vmatpush1.msra.mxu0 0.0
      %808 = vmatprep.subr.mxu0 0.0
      %809 = vmatpush1.msra.mxu0 0.0
      %810 = vmatprep.subr.mxu0 0.0
      %811 = vmatpush1.msra.mxu0 0.0
      %812 = vmatprep.subr.mxu0 0.0
      %813 = vmatpush1.msra.mxu0 0.0
      %814 = vmatprep.subr.mxu0 0.0
      %815 = vmatpush1.msra.mxu0 0.0
      %816 = vmatprep.subr.mxu0 0.0
      %817 = vmatpush1.msra.mxu0 0.0
      %818 = vmatprep.subr.mxu0 0.0
      %819 = vmatpush1.msra.mxu0 0.0
      %820 = vmatprep.subr.mxu0 0.0
      %821 = vmatpush1.msra.mxu0 0.0
      %822 = vmatprep.subr.mxu0 0.0
      %823 = vmatpush1.msra.mxu0 0.0
      %824 = vmatprep.subr.mxu0 0.0
      %825 = vmatpush1.msra.mxu0 0.0
      %826 = vmatprep.subr.mxu0 0.0
      %827 = vmatpush1.msra.mxu0 0.0
      %828 = vmatprep.subr.mxu0 0.0
      %829 = vmatpush1.msra.mxu0 0.0
      %830 = vmatprep.subr.mxu0 0.0
      %831 = vmatpush1.msra.mxu0 0.0
      %832 = vmatprep.subr.mxu0 0.0
      %833 = vmatpush1.msra.mxu0 0.0
      %834 = vmatprep.subr.mxu0 0.0
      %835 = vmatpush1.msra.mxu0 0.0
      %836 = vmatprep.subr.mxu0 0.0
      %837 = vmatpush1.msra.mxu0 0.0
      %838 = vmatprep.subr.mxu0 0.0
      %839 = vmatpush1.msra.mxu0 0.0
      %840 = vmatprep.subr.mxu0 0.0
      %841 = vmatpush1.msra.mxu0 0.0
      %842 = vmatprep.subr.mxu0 0.0
      %843 = vmatpush1.msra.mxu0 0.0
      %844 = vmatprep.subr.mxu0 0.0
      %845 = vmatpush1.msra.mxu0 0.0
      %846 = vmatprep.subr.mxu0 0.0
      %847 = vmatpush1.msra.mxu0 0.0
      %848 = vmatprep.subr.mxu0 0.0
      %849 = vmatpush1.msra.mxu0 0.0
      %850 = vmatprep.subr.mxu0 0.0
      %851 = vmatpush1.msra.mxu0 0.0
      %852 = vmatprep.subr.mxu0 0.0
      %853 = vmatpush1.msra.mxu0 0.0
      %854 = vmatprep.subr.mxu0 0.0
      %855 = vmatpush1.msra.mxu0 0.0
      %856 = vmatprep.subr.mxu0 0.0
      %857 = vmatpush1.msra.mxu0 0.0
      %858 = vmatprep.subr.mxu0 0.0
      %859 = vmatpush1.msra.mxu0 0.0
      %860 = vmatprep.subr.mxu0 0.0
      %861 = vmatpush1.msra.mxu0 0.0
      %862 = vmatprep.mubr.f32.mxu0 0.0
      %863 = vmatmul.mubr.f32.gmra.mrb[0].mxu0 %v793
      %v864 = vpop.f32.mrb[0].mxu0
      %v865 = vadd.f32 0.0, %v864
      %v866 = vpop.f32.mrb[0].mxu0
      %867 = vmatprep.mubr.f32.mxu0 0.0
      %868 = vmatmul.mubr.f32.gmra.mrb[0].mxu0 %v796
      %v869 = vpop.f32.mrb[0].mxu0
      %v870 = vadd.f32 0.0, %v869
      %v871 = vpop.f32.mrb[0].mxu0
      %872 = vdwg.mxu0
      %873 = vrot.lane.b32.xlu0 %v231, 125
      %v874 = vpop.permute.xlu0 %873
      %875 = vrot.lane.b32.xlu0 %v232, 125
      %v876 = vpop.permute.xlu0 %875
      %877 = vrot.lane.b32.xlu0 %v233, 125
      %v878 = vpop.permute.xlu0 %877
      %879 = vrot.lane.b32.xlu0 %v234, 125
      %v880 = vpop.permute.xlu0 %879
      %881 = vrot.lane.b32.xlu0 %v235, 125
      %v882 = vpop.permute.xlu0 %881
      %883 = vrot.lane.b32.xlu0 %v236, 125
      %v884 = vpop.permute.xlu0 %883
      %885 = vrot.lane.b32.xlu0 %v237, 125
      %v886 = vpop.permute.xlu0 %885
      %887 = vrot.lane.b32.xlu0 %v238, 125
      %v888 = vpop.permute.xlu0 %887
      %v898 = vsel %vm240, %v600, 0
      %v901 = vsel %vm240, %v601, 0
      %903 = vmatprep.subr.mxu0 0.0
      %904 = vmatpush1.msra.mxu0 %v874
      %905 = vmatprep.subr.mxu0 0.0
      %906 = vmatpush1.msra.mxu0 %v876
      %907 = vmatprep.subr.mxu0 0.0
      %908 = vmatpush1.msra.mxu0 %v878
      %909 = vmatprep.subr.mxu0 0.0
      %910 = vmatpush1.msra.mxu0 %v880
      %911 = vmatprep.subr.mxu0 0.0
      %912 = vmatpush1.msra.mxu0 %v882
      %913 = vmatprep.subr.mxu0 0.0
      %914 = vmatpush1.msra.mxu0 %v884
      %915 = vmatprep.subr.mxu0 0.0
      %916 = vmatpush1.msra.mxu0 %v886
      %917 = vmatprep.subr.mxu0 0.0
      %918 = vmatpush1.msra.mxu0 %v888
      %919 = vmatprep.subr.mxu0 0.0
      %920 = vmatpush1.msra.mxu0 0.0
      %921 = vmatprep.subr.mxu0 0.0
      %922 = vmatpush1.msra.mxu0 0.0
      %923 = vmatprep.subr.mxu0 0.0
      %924 = vmatpush1.msra.mxu0 0.0
      %925 = vmatprep.subr.mxu0 0.0
      %926 = vmatpush1.msra.mxu0 0.0
      %927 = vmatprep.subr.mxu0 0.0
      %928 = vmatpush1.msra.mxu0 0.0
      %929 = vmatprep.subr.mxu0 0.0
      %930 = vmatpush1.msra.mxu0 0.0
      %931 = vmatprep.subr.mxu0 0.0
      %932 = vmatpush1.msra.mxu0 0.0
      %933 = vmatprep.subr.mxu0 0.0
      %934 = vmatpush1.msra.mxu0 0.0
      %935 = vmatprep.subr.mxu0 0.0
      %936 = vmatpush1.msra.mxu0 0.0
      %937 = vmatprep.subr.mxu0 0.0
      %938 = vmatpush1.msra.mxu0 0.0
      %939 = vmatprep.subr.mxu0 0.0
      %940 = vmatpush1.msra.mxu0 0.0
      %941 = vmatprep.subr.mxu0 0.0
      %942 = vmatpush1.msra.mxu0 0.0
      %943 = vmatprep.subr.mxu0 0.0
      %944 = vmatpush1.msra.mxu0 0.0
      %945 = vmatprep.subr.mxu0 0.0
      %946 = vmatpush1.msra.mxu0 0.0
      %947 = vmatprep.subr.mxu0 0.0
      %948 = vmatpush1.msra.mxu0 0.0
      %949 = vmatprep.subr.mxu0 0.0
      %950 = vmatpush1.msra.mxu0 0.0
      %951 = vmatprep.subr.mxu0 0.0
      %952 = vmatpush1.msra.mxu0 0.0
      %953 = vmatprep.subr.mxu0 0.0
      %954 = vmatpush1.msra.mxu0 0.0
      %955 = vmatprep.subr.mxu0 0.0
      %956 = vmatpush1.msra.mxu0 0.0
      %957 = vmatprep.subr.mxu0 0.0
      %958 = vmatpush1.msra.mxu0 0.0
      %959 = vmatprep.subr.mxu0 0.0
      %960 = vmatpush1.msra.mxu0 0.0
      %961 = vmatprep.subr.mxu0 0.0
      %962 = vmatpush1.msra.mxu0 0.0
      %963 = vmatprep.subr.mxu0 0.0
      %964 = vmatpush1.msra.mxu0 0.0
      %965 = vmatprep.subr.mxu0 0.0
      %966 = vmatpush1.msra.mxu0 0.0
      %967 = vmatprep.mubr.f32.mxu0 0.0
      %968 = vmatmul.mubr.f32.gmra.mrb[0].mxu0 %v898
      %v969 = vpop.f32.mrb[0].mxu0
      %v970 = vadd.f32 %v865, %v969
      %v971 = vpop.f32.mrb[0].mxu0
      %972 = vmatprep.mubr.f32.mxu0 0.0
      %973 = vmatmul.mubr.f32.gmra.mrb[0].mxu0 %v901
      %v974 = vpop.f32.mrb[0].mxu0
      %v975 = vadd.f32 %v870, %v974
      %v976 = vpop.f32.mrb[0].mxu0
      %977 = vdwg.mxu0
      %v978 = vlaneseq
      %v979 = vshrl.u32 %v978, 7
      %v980 = vsub.s32 0, %v979
      %v981 = vrot.slane %v774, %v980
      %v982 = vadd.f32 %v970, %v981
      %v983 = vadd.f32 %v975, %v981
      %vm984 = vcmask 7168
      %985 = vst.msk [vmem:[%s226] sm:$0xff] %vm984, %v982
      %986 = vst.msk [vmem:[%s226 + $0x8] sm:$0xff] %vm984, %v983
      %s987 = smul.u32 2, %s16
      %p988 = scmp.lt.s32.totalorder %s987, 11
      %s989 = scalar_select %p988, %s987, 11
      %s990 = smul.addr %s989, 8
      %s991 = scalar_lea.vmem %s5, %s990
      // Predicated region
      $region41: #{tpu_custom_call.1} parent=39 // pred_check
        %p992 = pneg %p144
      $region42: #{tpu_custom_call.1} parent=39 // pred_check_branch
        %994 = sbr.rel (%p992) target = $region44
      $region43: #{tpu_custom_call.1} parent=39 // pred_region
        %s995 = smul.u32 2, %s16
      $region44: #{tpu_custom_call.1} parent=39 // pred_fallthru
        _
    $region40: #{tpu_custom_call.1} parent=5 // pred_fallthru
      _
    %p996 = scmp.le.s32.totalorder 2, %s11
    // Predicated region
    $region45: #{tpu_custom_call.1} parent=5 // pred_check
      %p997 = pneg %p996
    $region46: #{tpu_custom_call.1} parent=5 // pred_check_branch
      %999 = sbr.rel (%p997) target = $region48
    $region47: #{tpu_custom_call.1} parent=5 // pred_region
      %s1000 = ssub.s32 %s11, 2
      // Predicated region
      $region49: #{tpu_custom_call.1} parent=47 // pred_check
        %p1001 = pneg %p150
      $region50: #{tpu_custom_call.1} parent=47 // pred_check_branch
        %1003 = sbr.rel (%p1001) target = $region52
      $region51: #{tpu_custom_call.1} parent=47 // pred_region
        %s1004 = smul.u32 2, %s17
        %p1005 = scmp.lt.s32.totalorder %s1004, 11
        %s1006 = scalar_select %p1005, %s1004, 11
        %s1007 = smul.addr %s1006, 8
        %s1008 = scalar_lea.vmem %s5, %s1007
      $region52: #{tpu_custom_call.1} parent=47 // pred_fallthru
        _
    $region48: #{tpu_custom_call.1} parent=5 // pred_fallthru
      _
  $region6: #{tpu_custom_call.1} parent=0 // loop_footer
    %s15 = sadd.s32 1, %s11
  $region7: #{tpu_custom_call.1} parent=0 // loop_footer_branch
    %10 = sbr.rel target = $region3
  $region8: #{tpu_custom_call.1} parent=0 // loop_exit
    _

</llo_original>
